<compile_context>
chip_gen: v5e
topology: v5e:2x2
jax: 0.10.0
libtpu: 0.0.40
codegen_flags: <defaults>
</compile_context>

<pallas_src>
import jax
import jax.numpy as jnp
from jax.experimental import pallas as pl
from jax.experimental.pallas import tpu as pltpu


def _round_up(a, m):
    return ((a + m - 1) // m) * m


def _make_pinn_kernel(num_hidden_linears):
    """Kernel for: tanh(Linear_in) -> [Linear+tanh]*H -> Linear_out (padded)."""

    def kernel(x_ref, *refs):
        out_ref = refs[-1]
        p = refs[:-1]  # flat (w, b) pairs: input, hidden..., output

        h = x_ref[...]

        # input layer + tanh
        w, b = p[0][...], p[1][...]
        h = jnp.tanh(jnp.dot(h, w, preferred_element_type=jnp.float32) + b)

        # hidden layers (Linear + tanh), fixed count -> unrolled at trace time
        idx = 2
        for _ in range(num_hidden_linears):
            w, b = p[idx][...], p[idx + 1][...]
            h = jnp.tanh(jnp.dot(h, w, preferred_element_type=jnp.float32) + b)
            idx += 2

        # output layer (no activation); W/b already lane-padded to 128 cols,
        # so this is a full-width, unmasked store.
        w, b = p[idx][...], p[idx + 1][...]
        out_ref[...] = (
            jnp.dot(h, w, preferred_element_type=jnp.float32) + b
        ).astype(out_ref.dtype)

    return kernel


def pinn_forward(x, params, *, tile_n=512, out_lane_pad=128):
    """Run the PINN forward pass via pallas_call.

    x:      (N, input_dim) float32
    params: list [(W, b), ...] with W of shape (in, out), b of shape (1, out)
    Returns (N, output_dim) float32.
    """
    N, in_dim = x.shape
    out_dim = params[-1][0].shape[1]
    num_hidden_linears = len(params) - 2

    # --- lane-dense output: pad last layer's columns to out_lane_pad ---------
    assert out_lane_pad >= out_dim
    pad_cols = out_lane_pad - out_dim
    w_out, b_out = params[-1]
    padded_params = list(params[:-1]) + [
        (jnp.pad(w_out, ((0, 0), (0, pad_cols))),
         jnp.pad(b_out, ((0, 0), (0, pad_cols))))
    ]
    flat_params = []
    for w, b in padded_params:
        flat_params.append(w)
        flat_params.append(b)

    # --- tile selection ------------------------------------------------------
    # Rows per tile: multiple of 8 (sublane), at most tile_n, and small enough
    # that the grid has >= 2 steps when N allows (v7x has 2 TensorCores).
    tn = max(8, min(tile_n, _round_up(pl.cdiv(N, 2), 8)))
    tn = _round_up(tn, 8)
    grid_n = pl.cdiv(N, tn)
    n_total = grid_n * tn
    n_pad = n_total - N
    x_p = jnp.pad(x, ((0, n_pad), (0, 0))) if n_pad else x

    # --- cost estimate (advisory) -------------------------------------------
    dims = [in_dim] + [w.shape[1] for w, _ in params]
    flops = n_total * sum(2 * a * b for a, b in zip(dims[:-1], dims[1:]))
    transcendentals = n_total * sum(dims[1:-1])
    bytes_accessed = 4 * (
        x_p.size
        + n_total * out_lane_pad
        + sum(int(w.size) + int(b.size) for w, b in padded_params)
    )
    cost = pl.CostEstimate(
        flops=int(flops),
        transcendentals=int(transcendentals),
        bytes_accessed=int(bytes_accessed),
    )

    # --- specs ---------------------------------------------------------------
    in_specs = [pl.BlockSpec((tn, in_dim), lambda i: (i, 0))]
    for arr in flat_params:
        # Full (tiny) parameter array resident every grid step.
        in_specs.append(pl.BlockSpec(arr.shape, lambda i: (0, 0)))
    out_spec = pl.BlockSpec((tn, out_lane_pad), lambda i: (i, 0))

    kernel = _make_pinn_kernel(num_hidden_linears)

    out_padded = pl.pallas_call(
        kernel,
        out_shape=jax.ShapeDtypeStruct((n_total, out_lane_pad), jnp.float32),
        grid_spec=pltpu.PrefetchScalarGridSpec(
            num_scalar_prefetch=0,
            grid=(grid_n,),
            in_specs=in_specs,
            out_specs=out_spec,
        ),
        compiler_params=pltpu.CompilerParams(
            dimension_semantics=("parallel",),
            vmem_limit_bytes=32 * 1024 * 1024,
        ),
        cost_estimate=cost,
    )(x_p, *flat_params)

    return out_padded[:N, :out_dim]


def init_pinn_params(key, num_layers, num_neurons, input_dim=3, output_dim=4):
    """Deterministic init matching PyTorch nn.Linear defaults:
    W, b ~ U(-1/sqrt(fan_in), 1/sqrt(fan_in)).
    Weights returned as (in_features, out_features)."""
    dims = [input_dim] + list(num_neurons) + [output_dim]
    params = []
    for i in range(len(dims) - 1):
        fan_in, fan_out = dims[i], dims[i + 1]
        key, kw, kb = jax.random.split(key, 3)
        bound = 1.0 / jnp.sqrt(jnp.float32(fan_in))
        w = jax.random.uniform(
            kw, (fan_in, fan_out), jnp.float32, minval=-bound, maxval=bound
        )
        b = jax.random.uniform(
            kb, (1, fan_out), jnp.float32, minval=-bound, maxval=bound
        )
        params.append((w, b))
    return params


def pinn_reference(x, params):
    """Pure-JAX reference of the same forward (for correctness check)."""
    h = jnp.tanh(x @ params[0][0] + params[0][1])
    for w, b in params[1:-1]:
        h = jnp.tanh(h @ w + b)
    w, b = params[-1]
    return h @ w + b


if __name__ == "__main__":
    key = jax.random.PRNGKey(0)

    # PINN config: num_layers=3, num_neurons=[32, 32, 32], input=3, output=4
    num_layers = 3
    num_neurons = [32, 32, 32]
    input_dim, output_dim = 3, 4

    params = init_pinn_params(
        key, num_layers, num_neurons, input_dim=input_dim, output_dim=output_dim
    )

    # Case 1: tiny batch (exercises small-N tile clamping, 2 grid steps).
    key, kx1 = jax.random.split(key)
    x1 = jax.random.normal(kx1, (16, input_dim), dtype=jnp.float32)
    out1 = jax.block_until_ready(pinn_forward(x1, params))
    ref1 = pinn_reference(x1, params)
    assert out1.shape == (16, output_dim)
    assert jnp.allclose(out1, ref1, atol=1e-5, rtol=1e-5)

    # Case 2: ragged batch not divisible by the tile (exercises zero-padding
    # of rows and the lane-dense padded output slab).
    key, kx2 = jax.random.split(key)
    x2 = jax.random.normal(kx2, (200, input_dim), dtype=jnp.float32)
    out2 = jax.block_until_ready(pinn_forward(x2, params))
    ref2 = pinn_reference(x2, params)
    assert out2.shape == (200, output_dim)
    assert jnp.allclose(out2, ref2, atol=1e-5, rtol=1e-5)

    print("KERNEL_OK")
</pallas_src>

<mosaic_0001>
module attributes {stable_mosaic.version = 11 : i64} {
  func.func @kernel(%arg0: i32, %arg1: memref<8x3xf32, #tpu.memory_space<vmem>>, %arg2: memref<3x32xf32, #tpu.memory_space<vmem>>, %arg3: memref<1x32xf32, #tpu.memory_space<vmem>>, %arg4: memref<32x32xf32, #tpu.memory_space<vmem>>, %arg5: memref<1x32xf32, #tpu.memory_space<vmem>>, %arg6: memref<32x32xf32, #tpu.memory_space<vmem>>, %arg7: memref<1x32xf32, #tpu.memory_space<vmem>>, %arg8: memref<32x128xf32, #tpu.memory_space<vmem>>, %arg9: memref<1x128xf32, #tpu.memory_space<vmem>>, %arg10: memref<8x128xf32, #tpu.memory_space<vmem>>) attributes {dimension_semantics = [#tpu.dimension_semantics<parallel>], iteration_bounds = array<i64: 2>, scalar_prefetch = 0 : i64, scratch_operands = 0 : i64, tpu.core_type = #tpu.core_type<tc>, window_params = [{transform_indices = @transform_0, window_bounds = array<i64: 8, 3>}, {pipeline_mode = #tpu.pipeline_mode<synchronous>, transform_indices = @transform_1, window_bounds = array<i64: 3, 32>}, {pipeline_mode = #tpu.pipeline_mode<synchronous>, transform_indices = @transform_2, window_bounds = array<i64: 1, 32>}, {pipeline_mode = #tpu.pipeline_mode<synchronous>, transform_indices = @transform_3, window_bounds = array<i64: 32, 32>}, {pipeline_mode = #tpu.pipeline_mode<synchronous>, transform_indices = @transform_4, window_bounds = array<i64: 1, 32>}, {pipeline_mode = #tpu.pipeline_mode<synchronous>, transform_indices = @transform_5, window_bounds = array<i64: 32, 32>}, {pipeline_mode = #tpu.pipeline_mode<synchronous>, transform_indices = @transform_6, window_bounds = array<i64: 1, 32>}, {pipeline_mode = #tpu.pipeline_mode<synchronous>, transform_indices = @transform_7, window_bounds = array<i64: 32, 128>}, {pipeline_mode = #tpu.pipeline_mode<synchronous>, transform_indices = @transform_8, window_bounds = array<i64: 1, 128>}, {transform_indices = @transform_9, window_bounds = array<i64: 8, 128>}]} {
    %c0 = arith.constant 0 : index
    %c0_0 = arith.constant 0 : index
    %0 = vector.load %arg1[%c0, %c0_0] : memref<8x3xf32, #tpu.memory_space<vmem>>, vector<8x3xf32>
    %c0_1 = arith.constant 0 : index
    %c0_2 = arith.constant 0 : index
    %1 = vector.load %arg2[%c0_1, %c0_2] : memref<3x32xf32, #tpu.memory_space<vmem>>, vector<3x32xf32>
    %c0_3 = arith.constant 0 : index
    %c0_4 = arith.constant 0 : index
    %2 = vector.load %arg3[%c0_3, %c0_4] : memref<1x32xf32, #tpu.memory_space<vmem>>, vector<1x32xf32>
    %cst = arith.constant dense<0.000000e+00> : vector<8x32xf32>
    %3 = tpu.matmul %0, %1, %cst {dimension_numbers = #tpu.dot_dimension_numbers<[1], [0], [0], [1], [0, 0, 1, 1], [], []>} : vector<8x3xf32>, vector<3x32xf32>, vector<8x32xf32> -> vector<8x32xf32>
    %4 = vector.broadcast %2 : vector<1x32xf32> to vector<8x32xf32>
    %5 = arith.addf %3, %4 : vector<8x32xf32>
    %6 = math.tanh %5 : vector<8x32xf32>
    %c0_5 = arith.constant 0 : index
    %c0_6 = arith.constant 0 : index
    %7 = vector.load %arg4[%c0_5, %c0_6] : memref<32x32xf32, #tpu.memory_space<vmem>>, vector<32x32xf32>
    %c0_7 = arith.constant 0 : index
    %c0_8 = arith.constant 0 : index
    %8 = vector.load %arg5[%c0_7, %c0_8] : memref<1x32xf32, #tpu.memory_space<vmem>>, vector<1x32xf32>
    %cst_9 = arith.constant dense<0.000000e+00> : vector<8x32xf32>
    %9 = tpu.matmul %6, %7, %cst_9 {dimension_numbers = #tpu.dot_dimension_numbers<[1], [0], [0], [1], [0, 0, 1, 1], [], []>} : vector<8x32xf32>, vector<32x32xf32>, vector<8x32xf32> -> vector<8x32xf32>
    %10 = vector.broadcast %8 : vector<1x32xf32> to vector<8x32xf32>
    %11 = arith.addf %9, %10 : vector<8x32xf32>
    %12 = math.tanh %11 : vector<8x32xf32>
    %c0_10 = arith.constant 0 : index
    %c0_11 = arith.constant 0 : index
    %13 = vector.load %arg6[%c0_10, %c0_11] : memref<32x32xf32, #tpu.memory_space<vmem>>, vector<32x32xf32>
    %c0_12 = arith.constant 0 : index
    %c0_13 = arith.constant 0 : index
    %14 = vector.load %arg7[%c0_12, %c0_13] : memref<1x32xf32, #tpu.memory_space<vmem>>, vector<1x32xf32>
    %cst_14 = arith.constant dense<0.000000e+00> : vector<8x32xf32>
    %15 = tpu.matmul %12, %13, %cst_14 {dimension_numbers = #tpu.dot_dimension_numbers<[1], [0], [0], [1], [0, 0, 1, 1], [], []>} : vector<8x32xf32>, vector<32x32xf32>, vector<8x32xf32> -> vector<8x32xf32>
    %16 = vector.broadcast %14 : vector<1x32xf32> to vector<8x32xf32>
    %17 = arith.addf %15, %16 : vector<8x32xf32>
    %18 = math.tanh %17 : vector<8x32xf32>
    %c0_15 = arith.constant 0 : index
    %c0_16 = arith.constant 0 : index
    %19 = vector.load %arg8[%c0_15, %c0_16] : memref<32x128xf32, #tpu.memory_space<vmem>>, vector<32x128xf32>
    %c0_17 = arith.constant 0 : index
    %c0_18 = arith.constant 0 : index
    %20 = vector.load %arg9[%c0_17, %c0_18] : memref<1x128xf32, #tpu.memory_space<vmem>>, vector<1x128xf32>
    %cst_19 = arith.constant dense<0.000000e+00> : vector<8x128xf32>
    %21 = tpu.matmul %18, %19, %cst_19 {dimension_numbers = #tpu.dot_dimension_numbers<[1], [0], [0], [1], [0, 0, 1, 1], [], []>} : vector<8x32xf32>, vector<32x128xf32>, vector<8x128xf32> -> vector<8x128xf32>
    %22 = vector.broadcast %20 : vector<1x128xf32> to vector<8x128xf32>
    %23 = arith.addf %21, %22 : vector<8x128xf32>
    %c0_20 = arith.constant 0 : index
    %c0_21 = arith.constant 0 : index
    %24 = vector.load %arg10[%c0_20, %c0_21] : memref<8x128xf32, #tpu.memory_space<vmem>>, vector<8x128xf32>
    tpu.vector_store %arg10[%c0_20, %c0_21], %23 {strides = array<i32>} : memref<8x128xf32, #tpu.memory_space<vmem>>, vector<8x128xf32>,
    return
  }
  func.func @transform_0(%arg0: i32) -> (i32, i32) {
    %c0_i32 = arith.constant 0 : i32
    %c0_i32_0 = arith.constant 0 : i32
    return %arg0, %c0_i32 : i32, i32
  }
  func.func @transform_1(%arg0: i32) -> (i32, i32) {
    %c0_i32 = arith.constant 0 : i32
    %c0_i32_0 = arith.constant 0 : i32
    %c0_i32_1 = arith.constant 0 : i32
    return %c0_i32, %c0_i32_0 : i32, i32
  }
  func.func @transform_2(%arg0: i32) -> (i32, i32) {
    %c0_i32 = arith.constant 0 : i32
    %c0_i32_0 = arith.constant 0 : i32
    %c0_i32_1 = arith.constant 0 : i32
    return %c0_i32, %c0_i32_0 : i32, i32
  }
  func.func @transform_3(%arg0: i32) -> (i32, i32) {
    %c0_i32 = arith.constant 0 : i32
    %c0_i32_0 = arith.constant 0 : i32
    %c0_i32_1 = arith.constant 0 : i32
    return %c0_i32, %c0_i32_0 : i32, i32
  }
  func.func @transform_4(%arg0: i32) -> (i32, i32) {
    %c0_i32 = arith.constant 0 : i32
    %c0_i32_0 = arith.constant 0 : i32
    %c0_i32_1 = arith.constant 0 : i32
    return %c0_i32, %c0_i32_0 : i32, i32
  }
  func.func @transform_5(%arg0: i32) -> (i32, i32) {
    %c0_i32 = arith.constant 0 : i32
    %c0_i32_0 = arith.constant 0 : i32
    %c0_i32_1 = arith.constant 0 : i32
    return %c0_i32, %c0_i32_0 : i32, i32
  }
  func.func @transform_6(%arg0: i32) -> (i32, i32) {
    %c0_i32 = arith.constant 0 : i32
    %c0_i32_0 = arith.constant 0 : i32
    %c0_i32_1 = arith.constant 0 : i32
    return %c0_i32, %c0_i32_0 : i32, i32
  }
  func.func @transform_7(%arg0: i32) -> (i32, i32) {
    %c0_i32 = arith.constant 0 : i32
    %c0_i32_0 = arith.constant 0 : i32
    %c0_i32_1 = arith.constant 0 : i32
    return %c0_i32, %c0_i32_0 : i32, i32
  }
  func.func @transform_8(%arg0: i32) -> (i32, i32) {
    %c0_i32 = arith.constant 0 : i32
    %c0_i32_0 = arith.constant 0 : i32
    %c0_i32_1 = arith.constant 0 : i32
    return %c0_i32, %c0_i32_0 : i32, i32
  }
  func.func @transform_9(%arg0: i32) -> (i32, i32) {
    %c0_i32 = arith.constant 0 : i32
    %c0_i32_0 = arith.constant 0 : i32
    return %arg0, %c0_i32 : i32, i32
  }
}

</mosaic_0001>

<llo_original>
// kernel: tpu_custom_call.1
$region0: #{tpu_custom_call.1}
  #allocation0 [shape = 'u32[]', space=smem, size = 0x4, offset = 0x4, fixed_abs, tag = 'smem constant byte address 0x4 - core index']
  #allocation1 [shape = 'u32[72,128]{1,0:T(1,128)}', space=vmem, size = 0x9000, scoped, tag = 'internal scratch']
  %s0 = inlined_call_operand.vmem [shape: f32[16,3], index: 0, kind: input, shape index: {}]
  %s1 = inlined_call_operand.vmem [shape: f32[3,32], index: 1, kind: input, shape index: {}]
  %s2 = inlined_call_operand.vmem [shape: f32[1,32], index: 2, kind: input, shape index: {}]
  %s3 = inlined_call_operand.hbm [shape: f32[32,32], index: 3, kind: input, shape index: {}]
  %s4 = inlined_call_operand.vmem [shape: f32[1,32], index: 4, kind: input, shape index: {}]
  %s5 = inlined_call_operand.hbm [shape: f32[32,32], index: 5, kind: input, shape index: {}]
  %s6 = inlined_call_operand.vmem [shape: f32[1,32], index: 6, kind: input, shape index: {}]
  %s7 = inlined_call_operand.hbm [shape: f32[32,128], index: 7, kind: input, shape index: {}]
  %s8 = inlined_call_operand.vmem [shape: f32[1,128], index: 8, kind: input, shape index: {}]
  %s9 = inlined_call_operand.hbm [shape: f32[16,128], index: 9, kind: output, shape index: {}]
  %s10 = sld [smem:[#allocation0]]
  $region81: #{tpu_custom_call.1} parent=0
    _
  %s12 = ssub.s32 1, %s10
  %s13 = scalar_select 0, %s12, %s10
  $region1: #{tpu_custom_call.1} parent=0
    #allocation2 [shape = 'u8[16384]{0}', space=vmem, size = 0x4000, scoped, tag = 'input window, operand 3, single buffered']
    #allocation3 [shape = 's32[2]{0}', space=sflag, size = 0x8, scoped, tag = 'scoped memory for tpu_custom_call.1']
    #allocation4 [shape = 's32[2]{0}', space=sflag, size = 0x8, scoped, tag = 'scoped memory for tpu_custom_call.1']
    #allocation5 [shape = 'u8[16384]{0}', space=vmem, size = 0x4000, scoped, tag = 'input window, operand 5, single buffered']
    #allocation6 [shape = 's32[1]{0}', space=sflag, size = 0x4, scoped, tag = 'scoped memory for tpu_custom_call.1']
    #allocation7 [shape = 'u8[16384]{0}', space=vmem, size = 0x4000, scoped, tag = 'input window, operand 7, single buffered']
    #allocation8 [shape = 'u8[8192]{0}', space=vmem, size = 0x2000, scoped, tag = 'output window, operand 0']
    %14 = vsyncpa [#allocation3], 0
    %15 = vsyncpa [#allocation6], 0
    %16 = vsyncpa [#allocation4], 0
    %s17 = scalar_lea.sflag [#allocation4], 1
    %18 = vsyncpa %s17, 0
    loop: start=0, step=1, limit=4
    $region2: #{tpu_custom_call.1} parent=1 // loop_pre_header
      _
    $region3: #{tpu_custom_call.1} parent=1 // loop_header
      %s20 = sphi 0, %s24
      %p21 = scmp.ge.s32.totalorder %s20, 4
      %s30 = sphi 0, %s32
      %s33 = sphi 0, %s30
      %s34 = sphi 0, %s33
      %s50 = sphi 0, %s34
      %s54 = sphi 0, %s54
      %s56 = sphi 0, %s54
      %s57 = sphi 0, %s56
      %s71 = sphi 0, %s57
      %s75 = sphi 0, %s75
      %s77 = sphi 0, %s75
      %s78 = sphi 0, %s77
      %s92 = sphi 0, %s78
      %s96 = sphi 0, %s96
      %s98 = sphi 0, %s96
      %s99 = sphi 0, %s98
      %s113 = sphi 0, %s99
      %s117 = sphi 0, %s117
      %s119 = sphi 0, %s117
      %s120 = sphi 0, %s119
      %s134 = sphi 0, %s120
      %s138 = sphi 0, %s138
      %s140 = sphi 0, %s138
      %s141 = sphi 0, %s140
      %s155 = sphi 0, %s141
      %s159 = sphi 0, %s159
      %s161 = sphi 0, %s159
      %s162 = sphi 0, %s161
      %s176 = sphi 0, %s162
      %s180 = sphi 0, %s180
      %s182 = sphi 0, %s180
      %s183 = sphi 0, %s182
      %s197 = sphi 0, %s183
      %s201 = sphi 0, %s201
      %s203 = sphi 0, %s201
      %s204 = sphi 0, %s203
      %s218 = sphi 0, %s204
      %s224 = sphi 0, %s226
      %s227 = sphi 0, %s224
      %s228 = sphi 0, %s227
      %s244 = sphi 0, %s228
    $region4: #{tpu_custom_call.1} parent=1 // loop_header_branch
      %23 = sbr.rel (%p21) target = $region8
    $region5: #{tpu_custom_call.1} parent=1 // loop_body
      %s25 = ssub.s32 %s20, 1
      %s26 = ssub.s32 %s20, 2
      %s27 = sadd.s32 %s20, 1
      %s28 = ssub.s32 %s20, %s27
      %p29 = scmp.eq.s32.totalorder %s28, 0
      %s31 = sadd.s32 %s30, 1
      %s32 = scalar_select %p29, %s30, %s31
      %p35 = pneg %p29
      %p36 = scmp.eq.s32.totalorder %s20, 1
      %p37 = por %p35, %p36
      %p38 = scmp.ne.s32.totalorder %s30, %s33
      %p39 = scmp.eq.s32.totalorder %s20, 0
      %p40 = por %p38, %p39
      %p41 = scmp.ne.s32.totalorder %s30, %s33
      %p42 = scmp.eq.s32.totalorder %s25, 1
      %p43 = por %p41, %p42
      %p44 = scmp.ne.s32.totalorder %s33, %s34
      %p45 = scmp.eq.s32.totalorder %s25, 0
      %p46 = por %p44, %p45
      %p47 = scmp.ne.s32.totalorder %s33, %s34
      %p48 = scmp.eq.s32.totalorder %s26, 1
      %p49 = por %p47, %p48
      %p51 = scmp.ne.s32.totalorder %s34, %s50
      %p52 = scmp.eq.s32.totalorder %s26, 0
      %p53 = por %p51, %p52
      %s55 = sadd.s32 %s54, 1
      %p58 = scmp.eq.s32.totalorder %s20, 1
      %p59 = scmp.ne.s32.totalorder %s54, %s56
      %p60 = scmp.eq.s32.totalorder %s20, 0
      %p61 = por %p59, %p60
      %p62 = scmp.ne.s32.totalorder %s54, %s56
      %p63 = scmp.eq.s32.totalorder %s25, 1
      %p64 = por %p62, %p63
      %p65 = scmp.ne.s32.totalorder %s56, %s57
      %p66 = scmp.eq.s32.totalorder %s25, 0
      %p67 = por %p65, %p66
      %p68 = scmp.ne.s32.totalorder %s56, %s57
      %p69 = scmp.eq.s32.totalorder %s26, 1
      %p70 = por %p68, %p69
      %p72 = scmp.ne.s32.totalorder %s57, %s71
      %p73 = scmp.eq.s32.totalorder %s26, 0
      %p74 = por %p72, %p73
      %s76 = sadd.s32 %s75, 1
      %p79 = scmp.eq.s32.totalorder %s20, 1
      %p80 = scmp.ne.s32.totalorder %s75, %s77
      %p81 = scmp.eq.s32.totalorder %s20, 0
      %p82 = por %p80, %p81
      %p83 = scmp.ne.s32.totalorder %s75, %s77
      %p84 = scmp.eq.s32.totalorder %s25, 1
      %p85 = por %p83, %p84
      %p86 = scmp.ne.s32.totalorder %s77, %s78
      %p87 = scmp.eq.s32.totalorder %s25, 0
      %p88 = por %p86, %p87
      %p89 = scmp.ne.s32.totalorder %s77, %s78
      %p90 = scmp.eq.s32.totalorder %s26, 1
      %p91 = por %p89, %p90
      %p93 = scmp.ne.s32.totalorder %s78, %s92
      %p94 = scmp.eq.s32.totalorder %s26, 0
      %p95 = por %p93, %p94
      %s97 = sadd.s32 %s96, 1
      %p100 = scmp.eq.s32.totalorder %s20, 1
      %p101 = scmp.ne.s32.totalorder %s96, %s98
      %p102 = scmp.eq.s32.totalorder %s20, 0
      %p103 = por %p101, %p102
      %p104 = scmp.ne.s32.totalorder %s96, %s98
      %p105 = scmp.eq.s32.totalorder %s25, 1
      %p106 = por %p104, %p105
      %p107 = scmp.ne.s32.totalorder %s98, %s99
      %p108 = scmp.eq.s32.totalorder %s25, 0
      %p109 = por %p107, %p108
      %p110 = scmp.ne.s32.totalorder %s98, %s99
      %p111 = scmp.eq.s32.totalorder %s26, 1
      %p112 = por %p110, %p111
      %p114 = scmp.ne.s32.totalorder %s99, %s113
      %p115 = scmp.eq.s32.totalorder %s26, 0
      %p116 = por %p114, %p115
      %s118 = sadd.s32 %s117, 1
      %p121 = scmp.eq.s32.totalorder %s20, 1
      %p122 = scmp.ne.s32.totalorder %s117, %s119
      %p123 = scmp.eq.s32.totalorder %s20, 0
      %p124 = por %p122, %p123
      %p125 = scmp.ne.s32.totalorder %s117, %s119
      %p126 = scmp.eq.s32.totalorder %s25, 1
      %p127 = por %p125, %p126
      %p128 = scmp.ne.s32.totalorder %s119, %s120
      %p129 = scmp.eq.s32.totalorder %s25, 0
      %p130 = por %p128, %p129
      %p131 = scmp.ne.s32.totalorder %s119, %s120
      %p132 = scmp.eq.s32.totalorder %s26, 1
      %p133 = por %p131, %p132
      %p135 = scmp.ne.s32.totalorder %s120, %s134
      %p136 = scmp.eq.s32.totalorder %s26, 0
      %p137 = por %p135, %p136
      %s139 = sadd.s32 %s138, 1
      %p142 = scmp.eq.s32.totalorder %s20, 1
      %p143 = scmp.ne.s32.totalorder %s138, %s140
      %p144 = scmp.eq.s32.totalorder %s20, 0
      %p145 = por %p143, %p144
      %p146 = scmp.ne.s32.totalorder %s138, %s140
      %p147 = scmp.eq.s32.totalorder %s25, 1
      %p148 = por %p146, %p147
      %p149 = scmp.ne.s32.totalorder %s140, %s141
      %p150 = scmp.eq.s32.totalorder %s25, 0
      %p151 = por %p149, %p150
      %p152 = scmp.ne.s32.totalorder %s140, %s141
      %p153 = scmp.eq.s32.totalorder %s26, 1
      %p154 = por %p152, %p153
      %p156 = scmp.ne.s32.totalorder %s141, %s155
      %p157 = scmp.eq.s32.totalorder %s26, 0
      %p158 = por %p156, %p157
      %s160 = sadd.s32 %s159, 1
      %p163 = scmp.eq.s32.totalorder %s20, 1
      %p164 = scmp.ne.s32.totalorder %s159, %s161
      %p165 = scmp.eq.s32.totalorder %s20, 0
      %p166 = por %p164, %p165
      %p167 = scmp.ne.s32.totalorder %s159, %s161
      %p168 = scmp.eq.s32.totalorder %s25, 1
      %p169 = por %p167, %p168
      %p170 = scmp.ne.s32.totalorder %s161, %s162
      %p171 = scmp.eq.s32.totalorder %s25, 0
      %p172 = por %p170, %p171
      %p173 = scmp.ne.s32.totalorder %s161, %s162
      %p174 = scmp.eq.s32.totalorder %s26, 1
      %p175 = por %p173, %p174
      %p177 = scmp.ne.s32.totalorder %s162, %s176
      %p178 = scmp.eq.s32.totalorder %s26, 0
      %p179 = por %p177, %p178
      %s181 = sadd.s32 %s180, 1
      %p184 = scmp.eq.s32.totalorder %s20, 1
      %p185 = scmp.ne.s32.totalorder %s180, %s182
      %p186 = scmp.eq.s32.totalorder %s20, 0
      %p187 = por %p185, %p186
      %p188 = scmp.ne.s32.totalorder %s180, %s182
      %p189 = scmp.eq.s32.totalorder %s25, 1
      %p190 = por %p188, %p189
      %p191 = scmp.ne.s32.totalorder %s182, %s183
      %p192 = scmp.eq.s32.totalorder %s25, 0
      %p193 = por %p191, %p192
      %p194 = scmp.ne.s32.totalorder %s182, %s183
      %p195 = scmp.eq.s32.totalorder %s26, 1
      %p196 = por %p194, %p195
      %p198 = scmp.ne.s32.totalorder %s183, %s197
      %p199 = scmp.eq.s32.totalorder %s26, 0
      %p200 = por %p198, %p199
      %s202 = sadd.s32 %s201, 1
      %p205 = scmp.eq.s32.totalorder %s20, 1
      %p206 = scmp.ne.s32.totalorder %s201, %s203
      %p207 = scmp.eq.s32.totalorder %s20, 0
      %p208 = por %p206, %p207
      %p209 = scmp.ne.s32.totalorder %s201, %s203
      %p210 = scmp.eq.s32.totalorder %s25, 1
      %p211 = por %p209, %p210
      %p212 = scmp.ne.s32.totalorder %s203, %s204
      %p213 = scmp.eq.s32.totalorder %s25, 0
      %p214 = por %p212, %p213
      %p215 = scmp.ne.s32.totalorder %s203, %s204
      %p216 = scmp.eq.s32.totalorder %s26, 1
      %p217 = por %p215, %p216
      %p219 = scmp.ne.s32.totalorder %s204, %s218
      %p220 = scmp.eq.s32.totalorder %s26, 0
      %p221 = por %p219, %p220
      %s222 = ssub.s32 %s20, %s27
      %p223 = scmp.eq.s32.totalorder %s222, 0
      %s225 = sadd.s32 %s224, 1
      %s226 = scalar_select %p223, %s224, %s225
      %p229 = pneg %p223
      %p230 = scmp.eq.s32.totalorder %s20, 1
      %p231 = por %p229, %p230
      %p232 = scmp.ne.s32.totalorder %s224, %s227
      %p233 = scmp.eq.s32.totalorder %s20, 0
      %p234 = por %p232, %p233
      %p235 = scmp.ne.s32.totalorder %s224, %s227
      %p236 = scmp.eq.s32.totalorder %s25, 1
      %p237 = por %p235, %p236
      %p238 = scmp.ne.s32.totalorder %s227, %s228
      %p239 = scmp.eq.s32.totalorder %s25, 0
      %p240 = por %p238, %p239
      %p241 = scmp.ne.s32.totalorder %s227, %s228
      %p242 = scmp.eq.s32.totalorder %s26, 1
      %p243 = por %p241, %p242
      %p245 = scmp.ne.s32.totalorder %s228, %s244
      %p246 = scmp.eq.s32.totalorder %s26, 0
      %p247 = por %p245, %p246
      %p248 = scmp.le.s32.totalorder 1, %s20
      %p249 = scmp.lt.s32.totalorder %s20, 3
      %p250 = pnand %p248, %p249
      %p251 = pneg %p250
      // Predicated region
      $region9: #{tpu_custom_call.1} parent=5 // pred_check
        _
      $region10: #{tpu_custom_call.1} parent=5 // pred_check_branch
        %253 = sbr.rel (%p250) target = $region12
      $region11: #{tpu_custom_call.1} parent=5 // pred_region
        %s254 = ssub.s32 %s20, 1
        // Predicated region
        $region13: #{tpu_custom_call.1} parent=11 // pred_check
          %p255 = pneg %p67
        $region14: #{tpu_custom_call.1} parent=11 // pred_check_branch
          %257 = sbr.rel (%p255) target = $region16
        $region15: #{tpu_custom_call.1} parent=11 // pred_region
          _
        $region16: #{tpu_custom_call.1} parent=11 // pred_fallthru
          _
        // Predicated region
        $region17: #{tpu_custom_call.1} parent=11 // pred_check
          %p258 = pneg %p88
        $region18: #{tpu_custom_call.1} parent=11 // pred_check_branch
          %260 = sbr.rel (%p258) target = $region20
        $region19: #{tpu_custom_call.1} parent=11 // pred_region
          _
        $region20: #{tpu_custom_call.1} parent=11 // pred_fallthru
          _
        // Predicated region
        $region21: #{tpu_custom_call.1} parent=11 // pred_check
          %p261 = pneg %p109
        $region22: #{tpu_custom_call.1} parent=11 // pred_check_branch
          %263 = sbr.rel (%p261) target = $region24
        $region23: #{tpu_custom_call.1} parent=11 // pred_region
          %265 = vsyncadd [#allocation3], 0
          %s266 = sshll.u32 %s3, 4
          %s267 = int_to_ptr.hbm [resolvable:$true] %s266
          %s268 = sshll.u32 [#allocation2], 4
          %s269 = int_to_ptr.vmem [resolvable:$true] %s268
          %274 = dma.hbm_to_vmem [thread:$0]  %s267, 512, %s269, [#allocation3], 128, 128, 8
        $region24: #{tpu_custom_call.1} parent=11 // pred_fallthru
          _
        // Predicated region
        $region25: #{tpu_custom_call.1} parent=11 // pred_check
          %p275 = pneg %p130
        $region26: #{tpu_custom_call.1} parent=11 // pred_check_branch
          %277 = sbr.rel (%p275) target = $region28
        $region27: #{tpu_custom_call.1} parent=11 // pred_region
          _
        $region28: #{tpu_custom_call.1} parent=11 // pred_fallthru
          _
        // Predicated region
        $region29: #{tpu_custom_call.1} parent=11 // pred_check
          %p278 = pneg %p151
        $region30: #{tpu_custom_call.1} parent=11 // pred_check_branch
          %280 = sbr.rel (%p278) target = $region32
        $region31: #{tpu_custom_call.1} parent=11 // pred_region
          %282 = vsyncadd [#allocation6], 0
          %s283 = sshll.u32 %s5, 4
          %s284 = int_to_ptr.hbm [resolvable:$true] %s283
          %s285 = sshll.u32 [#allocation5], 4
          %s286 = int_to_ptr.vmem [resolvable:$true] %s285
          %291 = dma.hbm_to_vmem [thread:$0]  %s284, 512, %s286, [#allocation6], 128, 128, 8
        $region32: #{tpu_custom_call.1} parent=11 // pred_fallthru
          _
        // Predicated region
        $region33: #{tpu_custom_call.1} parent=11 // pred_check
          %p292 = pneg %p172
        $region34: #{tpu_custom_call.1} parent=11 // pred_check_branch
          %294 = sbr.rel (%p292) target = $region36
        $region35: #{tpu_custom_call.1} parent=11 // pred_region
          _
        $region36: #{tpu_custom_call.1} parent=11 // pred_fallthru
          _
        // Predicated region
        $region37: #{tpu_custom_call.1} parent=11 // pred_check
          %p295 = pneg %p193
        $region38: #{tpu_custom_call.1} parent=11 // pred_check_branch
          %297 = sbr.rel (%p295) target = $region40
        $region39: #{tpu_custom_call.1} parent=11 // pred_region
          %299 = vsyncadd [#allocation6], 0
          %s300 = sshll.u32 %s7, 4
          %s301 = int_to_ptr.hbm [resolvable:$true] %s300
          %s302 = sshll.u32 [#allocation7], 4
          %s303 = int_to_ptr.vmem [resolvable:$true] %s302
          %308 = dma.hbm_to_vmem [thread:$0]  %s301, 512, %s303, [#allocation6], 128, 128, 8
        $region40: #{tpu_custom_call.1} parent=11 // pred_fallthru
          _
        // Predicated region
        $region41: #{tpu_custom_call.1} parent=11 // pred_check
          %p309 = pneg %p214
        $region42: #{tpu_custom_call.1} parent=11 // pred_check_branch
          %311 = sbr.rel (%p309) target = $region44
        $region43: #{tpu_custom_call.1} parent=11 // pred_region
          _
        $region44: #{tpu_custom_call.1} parent=11 // pred_fallthru
          _
      $region12: #{tpu_custom_call.1} parent=5 // pred_fallthru
        _
      %p312 = scmp.lt.s32.totalorder %s20, 2
      // Predicated region
      $region45: #{tpu_custom_call.1} parent=5 // pred_check
        %p313 = pneg %p312
      $region46: #{tpu_custom_call.1} parent=5 // pred_check_branch
        %315 = sbr.rel (%p313) target = $region48
      $region47: #{tpu_custom_call.1} parent=5 // pred_region
        // Predicated region
        $region49: #{tpu_custom_call.1} parent=47 // pred_check
          %p316 = pneg %p40
        $region50: #{tpu_custom_call.1} parent=47 // pred_check_branch
          %318 = sbr.rel (%p316) target = $region52
        $region51: #{tpu_custom_call.1} parent=47 // pred_region
          %p319 = scmp.lt.s32.totalorder %s20, 1
          %s320 = scalar_select %p319, %s20, 1
          %s321 = smul.addr %s320, 8
          %s322 = scalar_lea.vmem %s0, %s321
        $region52: #{tpu_custom_call.1} parent=47 // pred_fallthru
          _
      $region48: #{tpu_custom_call.1} parent=5 // pred_fallthru
        _
      %p323 = scmp.le.s32.totalorder 1, %s20
      %p324 = scmp.lt.s32.totalorder %s20, 3
      %p325 = pnand %p323, %p324
      %p326 = pneg %p325
      // Predicated region
      $region53: #{tpu_custom_call.1} parent=5 // pred_check
        _
      $region54: #{tpu_custom_call.1} parent=5 // pred_check_branch
        %328 = sbr.rel (%p325) target = $region56
      $region55: #{tpu_custom_call.1} parent=5 // pred_region
        %s329 = ssub.s32 %s20, 1
        // Predicated region
        $region57: #{tpu_custom_call.1} parent=55 // pred_check
          %p330 = pneg %p109
        $region58: #{tpu_custom_call.1} parent=55 // pred_check_branch
          %332 = sbr.rel (%p330) target = $region60
        $region59: #{tpu_custom_call.1} parent=55 // pred_region
          %334 = dma.done [#allocation3], 512
        $region60: #{tpu_custom_call.1} parent=55 // pred_fallthru
          _
        // Predicated region
        $region61: #{tpu_custom_call.1} parent=55 // pred_check
          %p335 = pneg %p151
        $region62: #{tpu_custom_call.1} parent=55 // pred_check_branch
          %337 = sbr.rel (%p335) target = $region64
        $region63: #{tpu_custom_call.1} parent=55 // pred_region
          %339 = dma.done [#allocation6], 512
        $region64: #{tpu_custom_call.1} parent=55 // pred_fallthru
          _
        // Predicated region
        $region65: #{tpu_custom_call.1} parent=55 // pred_check
          %p340 = pneg %p193
        $region66: #{tpu_custom_call.1} parent=55 // pred_check_branch
          %342 = sbr.rel (%p340) target = $region68
        $region67: #{tpu_custom_call.1} parent=55 // pred_region
          %344 = dma.done [#allocation6], 512
        $region68: #{tpu_custom_call.1} parent=55 // pred_fallthru
          _
        %p345 = scmp.lt.s32.totalorder %s25, 1
        %s346 = scalar_select %p345, %s25, 1
        %s347 = smul.addr %s346, 8
        %s348 = scalar_lea.vmem %s0, %s347
        %p349 = pneg %p46
        %p350 = pneg %p43
        %p351 = pneg %p67
        %p352 = pneg %p64
        %p353 = pneg %p88
        %p354 = pneg %p85
        %p355 = pneg %p109
        %p356 = pneg %p106
        %p357 = pneg %p130
        %p358 = pneg %p127
        %p359 = pneg %p151
        %p360 = pneg %p148
        %p361 = pneg %p172
        %p362 = pneg %p169
        %p363 = pneg %p193
        %p364 = pneg %p190
        %p365 = pneg %p214
        %p366 = pneg %p211
        %p367 = pneg %p240
        %p368 = pneg %p237
        %s369 = sand.u32 %s227, 1
        %s370 = scalar_lea.sflag [#allocation4], %s369
        %s371 = sand.u32 %s227, 1
        %s372 = smul.addr %s371, 8
        %s373 = scalar_lea.vmem [#allocation8], %s372
        %p374 = scmp.lt.s32.totalorder %s25, 1
        %s375 = scalar_select %p374, %s25, 1
        %s376 = smul.addr %s375, 8
        %s377 = scalar_lea.vmem %s0, %s376
        %v378 = vld [vmem:[%s377] sm:$0xff]
        %v379 = vld [vmem:[%s1] sm:$0x7]
        %v380 = vld [vmem:[%s2] sm:$0x1]
        %v382 = vperm.slane %v380, 0
        %vm384 = vcmask 23552
        %v386 = vsel %vm384, %v378, 0
        %vm388 = vcmask 1042432
        %v390 = vsel %vm388, %v379, 0
        %392 = vmatpush.msra.mxu0 0.0
        %393 = vmatpush.msra.mxu0 0.0
        %394 = vmatpush.msra.mxu0 0.0
        %395 = vmatpush.msra.mxu0 0.0
        %396 = vmatpush.msra.mxu0 0.0
        %397 = vmatpush.msra.mxu0 0.0
        %398 = vmatpush.msra.mxu0 0.0
        %399 = vmatpush.msra.mxu0 0.0
        %400 = vmatpush.msra.mxu0 0.0
        %401 = vmatpush.msra.mxu0 0.0
        %402 = vmatpush.msra.mxu0 0.0
        %403 = vmatpush.msra.mxu0 0.0
        %404 = vmatpush.msra.mxu0 0.0
        %405 = vmatpush.msra.mxu0 0.0
        %406 = vmatpush.msra.mxu0 0.0
        %407 = vmatpush.msra.mxu0 %v390
        %408 = vmatmul.f32.gmra.mxu0 %v386
        %v409 = vpop.f32.mrf.mxu0
        %v410 = vadd.f32 %v382, %v409
        %411 = vdwg.mxu0
        %v412 = vtanh.pop %v410
        %v413 = vld [vmem:[#allocation2] sm:$0xff]
        %v414 = vld [vmem:[#allocation2 + $0x8] sm:$0xff]
        %v415 = vld [vmem:[#allocation2 + $0x10] sm:$0xff]
        %v416 = vld [vmem:[#allocation2 + $0x18] sm:$0xff]
        %v417 = vld [vmem:[%s4] sm:$0x1]
        %v419 = vperm.slane %v417, 0
        %vm421 = vcmask 261120
        %v423 = vsel %vm421, %v412, 0
        %425 = vmatpush.msra.mxu0 0.0
        %426 = vmatpush.msra.mxu0 0.0
        %427 = vmatpush.msra.mxu0 0.0
        %428 = vmatpush.msra.mxu0 0.0
        %429 = vmatpush.msra.mxu0 0.0
        %430 = vmatpush.msra.mxu0 0.0
        %431 = vmatpush.msra.mxu0 0.0
        %432 = vmatpush.msra.mxu0 0.0
        %433 = vmatpush.msra.mxu0 0.0
        %434 = vmatpush.msra.mxu0 0.0
        %435 = vmatpush.msra.mxu0 0.0
        %436 = vmatpush.msra.mxu0 0.0
        %437 = vmatpush.msra.mxu0 %v416
        %438 = vmatpush.msra.mxu0 %v415
        %439 = vmatpush.msra.mxu0 %v414
        %440 = vmatpush.msra.mxu0 %v413
        %441 = vmatmul.f32.gmra.mxu0 %v423
        %v442 = vpop.f32.mrf.mxu0
        %v443 = vadd.f32 %v419, %v442
        %444 = vdwg.mxu0
        %v445 = vtanh.pop %v443
        %v446 = vld [vmem:[#allocation5] sm:$0xff]
        %v447 = vld [vmem:[#allocation5 + $0x8] sm:$0xff]
        %v448 = vld [vmem:[#allocation5 + $0x10] sm:$0xff]
        %v449 = vld [vmem:[#allocation5 + $0x18] sm:$0xff]
        %v450 = vld [vmem:[%s6] sm:$0x1]
        %v452 = vperm.slane %v450, 0
        %v455 = vsel %vm421, %v445, 0
        %457 = vmatpush.msra.mxu0 0.0
        %458 = vmatpush.msra.mxu0 0.0
        %459 = vmatpush.msra.mxu0 0.0
        %460 = vmatpush.msra.mxu0 0.0
        %461 = vmatpush.msra.mxu0 0.0
        %462 = vmatpush.msra.mxu0 0.0
        %463 = vmatpush.msra.mxu0 0.0
        %464 = vmatpush.msra.mxu0 0.0
        %465 = vmatpush.msra.mxu0 0.0
        %466 = vmatpush.msra.mxu0 0.0
        %467 = vmatpush.msra.mxu0 0.0
        %468 = vmatpush.msra.mxu0 0.0
        %469 = vmatpush.msra.mxu0 %v449
        %470 = vmatpush.msra.mxu0 %v448
        %471 = vmatpush.msra.mxu0 %v447
        %472 = vmatpush.msra.mxu0 %v446
        %473 = vmatmul.f32.gmra.mxu0 %v455
        %v474 = vpop.f32.mrf.mxu0
        %v475 = vadd.f32 %v452, %v474
        %476 = vdwg.mxu0
        %v477 = vtanh.pop %v475
        %v478 = vld [vmem:[#allocation7] sm:$0xff]
        %v479 = vld [vmem:[#allocation7 + $0x8] sm:$0xff]
        %v480 = vld [vmem:[#allocation7 + $0x10] sm:$0xff]
        %v481 = vld [vmem:[#allocation7 + $0x18] sm:$0xff]
        %v482 = vld [vmem:[%s8] sm:$0x1]
        %v484 = vperm.slane %v482, 0
        %v487 = vsel %vm421, %v477, 0
        %489 = vmatpush.msra.mxu0 0.0
        %490 = vmatpush.msra.mxu0 0.0
        %491 = vmatpush.msra.mxu0 0.0
        %492 = vmatpush.msra.mxu0 0.0
        %493 = vmatpush.msra.mxu0 0.0
        %494 = vmatpush.msra.mxu0 0.0
        %495 = vmatpush.msra.mxu0 0.0
        %496 = vmatpush.msra.mxu0 0.0
        %497 = vmatpush.msra.mxu0 0.0
        %498 = vmatpush.msra.mxu0 0.0
        %499 = vmatpush.msra.mxu0 0.0
        %500 = vmatpush.msra.mxu0 0.0
        %501 = vmatpush.msra.mxu0 %v481
        %502 = vmatpush.msra.mxu0 %v480
        %503 = vmatpush.msra.mxu0 %v479
        %504 = vmatpush.msra.mxu0 %v478
        %505 = vmatmul.f32.gmra.mxu0 %v487
        %v506 = vpop.f32.mrf.mxu0
        %v507 = vadd.f32 %v484, %v506
        %508 = vdwg.mxu0
        %509 = vst [vmem:[%s373] sm:$0xff] %v507
        %s510 = sand.u32 %s227, 1
        %s511 = scalar_lea.sflag [#allocation4], %s510
        %s512 = sand.u32 %s227, 1
        %s513 = smul.addr %s512, 8
        %s514 = scalar_lea.vmem [#allocation8], %s513
        // Predicated region
        $region69: #{tpu_custom_call.1} parent=55 // pred_check
          %p515 = pneg %p237
        $region70: #{tpu_custom_call.1} parent=55 // pred_check_branch
          %517 = sbr.rel (%p515) target = $region72
        $region71: #{tpu_custom_call.1} parent=55 // pred_region
          %519 = vsyncadd %s511, 0
          %s520 = smul.addr %s25, 8
          %s521 = scalar_lea.hbm %s9, %s520
          %s523 = sshll.u32 %s514, 4
          %s524 = int_to_ptr.vmem [resolvable:$true] %s523
          %s525 = sshll.u32 %s521, 4
          %s526 = int_to_ptr.hbm [resolvable:$true] %s525
          %528 = dma.vmem_to_hbm [thread:$0]  %s524, 128, %s526, %s511
        $region72: #{tpu_custom_call.1} parent=55 // pred_fallthru
          _
      $region56: #{tpu_custom_call.1} parent=5 // pred_fallthru
        _
      %p529 = scmp.le.s32.totalorder 2, %s20
      // Predicated region
      $region73: #{tpu_custom_call.1} parent=5 // pred_check
        %p530 = pneg %p529
      $region74: #{tpu_custom_call.1} parent=5 // pred_check_branch
        %532 = sbr.rel (%p530) target = $region76
      $region75: #{tpu_custom_call.1} parent=5 // pred_region
        %s533 = ssub.s32 %s20, 2
        // Predicated region
        $region77: #{tpu_custom_call.1} parent=75 // pred_check
          %p534 = pneg %p243
        $region78: #{tpu_custom_call.1} parent=75 // pred_check_branch
          %536 = sbr.rel (%p534) target = $region80
        $region79: #{tpu_custom_call.1} parent=75 // pred_region
          %s537 = sand.u32 %s228, 1
          %s538 = scalar_lea.sflag [#allocation4], %s537
          %s539 = sand.u32 %s228, 1
          %s540 = smul.addr %s539, 8
          %s541 = scalar_lea.vmem [#allocation8], %s540
          %543 = dma.done %s538, 128
        $region80: #{tpu_custom_call.1} parent=75 // pred_fallthru
          _
      $region76: #{tpu_custom_call.1} parent=5 // pred_fallthru
        _
    $region6: #{tpu_custom_call.1} parent=1 // loop_footer
      %s24 = sadd.s32 1, %s20
    $region7: #{tpu_custom_call.1} parent=1 // loop_footer_branch
      %19 = sbr.rel target = $region3
    $region8: #{tpu_custom_call.1} parent=1 // loop_exit
      _
    %544 = vsyncpa [#allocation3], 1
    %s545 = scalar_lea.sflag [#allocation3], 1
    %546 = vsyncpa %s545, 1
    %547 = vsyncpa [#allocation6], 1
    %548 = vsyncpa [#allocation4], 1
    %s549 = scalar_lea.sflag [#allocation4], 1
    %550 = vsyncpa %s549, 1

</llo_original>
